<compile_context>
chip_gen: v6e
topology: v6e:2x2x1
jax: 0.10.0
libtpu: 0.0.40
codegen_flags: <defaults>
</compile_context>

<pallas_src>
import jax
import jax.numpy as jnp
from jax.experimental import pallas as pl
from jax.experimental.pallas import tpu as pltpu

DROPOUT_P = 0.6


# ----------------------------- kernels ------------------------------------- #

def _policy_body(x_ref, mask_ref, w1_ref, b1_ref, w2_ref, b2_ref, o_ref):
    # First linear layer (transposed space): (H, S) @ (S, TB) -> (H, TB), f32 acc.
    h = jnp.dot(w1_ref[...], x_ref[...], preferred_element_type=jnp.float32)
    h = h + b1_ref[...]                       # bias broadcast (H, 1) -> (H, TB)

    if mask_ref is not None:                  # dropout: mask is {0, 1/keep_prob}, f32
        h = h * mask_ref[...]

    h = jnp.maximum(h, 0.0)                   # ReLU on the VPU, f32

    # Second linear layer: (A, H) @ (H, TB) -> (A, TB), f32 acc.
    out = jnp.dot(w2_ref[...], h.astype(w2_ref.dtype),
                  preferred_element_type=jnp.float32)
    out = out + b2_ref[...]                   # bias broadcast (A, 1) -> (A, TB)
    o_ref[...] = out.astype(o_ref.dtype)      # lane-dense store (A, TB)


def _policy_kernel_train(x_ref, mask_ref, w1_ref, b1_ref, w2_ref, b2_ref, o_ref):
    _policy_body(x_ref, mask_ref, w1_ref, b1_ref, w2_ref, b2_ref, o_ref)


def _policy_kernel_eval(x_ref, w1_ref, b1_ref, w2_ref, b2_ref, o_ref):
    _policy_body(x_ref, None, w1_ref, b1_ref, w2_ref, b2_ref, o_ref)


# ----------------------------- wrapper -------------------------------------- #

def policy_forward(x, params, *, dropout_mask=None, training=True,
                   block_batch=128, use_bf16=False):
    """Forward pass of Policy.

    x:            (B, state_size) f32
    params:       (w1, b1, w2, b2) in PyTorch layout:
                  w1 (layer_size, state_size), b1 (layer_size,),
                  w2 (action_size, layer_size), b2 (action_size,)
    dropout_mask: (layer_size, B) f32 scaled keep-mask (values in {0, 1/(1-p)}),
                  required when training=True.
    Returns:      (B, action_size) f32
    """
    w1, b1, w2, b2 = params
    B, S = x.shape
    H = w1.shape[0]
    A = w2.shape[0]

    # Transposed (lane-dense) layout: batch along lanes.
    x_t = x.T                                          # (S, B) — cheap XLA transpose

    # Batch (lane) tiling.
    if B >= 128:
        tb = max(128, (min(block_batch, ((B + 127) // 128) * 128) // 128) * 128)
        b_pad = ((B + tb - 1) // tb) * tb
    else:
        tb = B
        b_pad = B
    if b_pad != B:
        x_t = jnp.pad(x_t, ((0, 0), (0, b_pad - B)))

    mm_dtype = jnp.bfloat16 if use_bf16 else x.dtype
    x_t = x_t.astype(mm_dtype)
    w1c = w1.astype(mm_dtype)
    w2c = w2.astype(mm_dtype)
    b1c = b1.reshape(H, 1).astype(jnp.float32)
    b2c = b2.reshape(A, 1).astype(jnp.float32)

    grid = (b_pad // tb,)

    x_spec = pl.BlockSpec((S, tb), lambda i: (0, i))     # streamed per grid step
    w1_spec = pl.BlockSpec((H, S), lambda i: (0, 0))     # VMEM-resident across grid
    b1_spec = pl.BlockSpec((H, 1), lambda i: (0, 0))
    w2_spec = pl.BlockSpec((A, H), lambda i: (0, 0))
    b2_spec = pl.BlockSpec((A, 1), lambda i: (0, 0))
    o_spec = pl.BlockSpec((A, tb), lambda i: (0, i))     # lane-dense output tile

    compiler_params = pltpu.CompilerParams(dimension_semantics=("parallel",))
    out_shape = jax.ShapeDtypeStruct((A, b_pad), jnp.float32)

    if training:
        if dropout_mask is None:
            raise ValueError("dropout_mask is required when training=True")
        assert dropout_mask.shape == (H, B), dropout_mask.shape
        mask = dropout_mask.astype(jnp.float32)
        if b_pad != B:
            mask = jnp.pad(mask, ((0, 0), (0, b_pad - B)))
        mask_spec = pl.BlockSpec((H, tb), lambda i: (0, i))
        out_t = pl.pallas_call(
            _policy_kernel_train,
            out_shape=out_shape,
            grid=grid,
            in_specs=[x_spec, mask_spec, w1_spec, b1_spec, w2_spec, b2_spec],
            out_specs=o_spec,
            compiler_params=compiler_params,
        )(x_t, mask, w1c, b1c, w2c, b2c)
    else:
        out_t = pl.pallas_call(
            _policy_kernel_eval,
            out_shape=out_shape,
            grid=grid,
            in_specs=[x_spec, w1_spec, b1_spec, w2_spec, b2_spec],
            out_specs=o_spec,
            compiler_params=compiler_params,
        )(x_t, w1c, b1c, w2c, b2c)

    return out_t[:, :B].T.astype(x.dtype)               # back to (B, A)


# ----------------------------- params / reference --------------------------- #

def init_policy_params(key, state_size, layer_size, action_size):
    """Xavier-uniform weights (matching weights_init_), zero biases.
    Weights in PyTorch layout (out_features, in_features)."""
    k1, k2 = jax.random.split(key)

    def xavier(k, fan_out, fan_in):
        bound = (6.0 / (fan_in + fan_out)) ** 0.5
        return jax.random.uniform(
            k, (fan_out, fan_in), dtype=jnp.float32, minval=-bound, maxval=bound
        )

    w1 = xavier(k1, layer_size, state_size)
    b1 = jnp.zeros((layer_size,), dtype=jnp.float32)
    w2 = xavier(k2, action_size, layer_size)
    b2 = jnp.zeros((action_size,), dtype=jnp.float32)
    return (w1, b1, w2, b2)


def policy_ref(x, params, mask=None):
    """Pure-JAX reference (mask is (H, B) scaled keep-mask or None)."""
    w1, b1, w2, b2 = params
    h = x @ w1.T + b1
    if mask is not None:
        h = h * mask.T
    h = jnp.maximum(h, 0.0)
    return h @ w2.T + b2


# ----------------------------- demo ----------------------------------------- #

if __name__ == "__main__":
    state_size, layer_size, action_size = 16, 32, 8
    batch = 512   # large enough to exercise batch tiling (grid=(4,) with TB=128)

    key = jax.random.PRNGKey(0)
    kx, kp, kd = jax.random.split(key, 3)

    x = jax.random.normal(kx, (batch, state_size), dtype=jnp.float32)
    params = init_policy_params(kp, state_size, layer_size, action_size)

    # Dropout(p=0.6): keep with prob 0.4, survivors scaled by 1/0.4.
    keep_prob = 1.0 - DROPOUT_P
    keep = jax.random.bernoulli(kd, keep_prob, (layer_size, batch))
    mask = keep.astype(jnp.float32) / keep_prob

    out_train = policy_forward(x, params, dropout_mask=mask, training=True)
    out_eval = policy_forward(x, params, training=False)
    out_train_bf16 = policy_forward(x, params, dropout_mask=mask, training=True,
                                    use_bf16=True)

    jax.block_until_ready((out_train, out_eval, out_train_bf16))

    ref_train = policy_ref(x, params, mask)
    ref_eval = policy_ref(x, params, None)

    assert out_train.shape == (batch, action_size)
    assert out_eval.shape == (batch, action_size)
    assert jnp.allclose(out_train, ref_train, rtol=1e-5, atol=1e-5)
    assert jnp.allclose(out_eval, ref_eval, rtol=1e-5, atol=1e-5)
    assert jnp.allclose(out_train_bf16, ref_train, rtol=1e-1, atol=1e-1)

    print("KERNEL_OK")
</pallas_src>

<mosaic_0001>
module attributes {stable_mosaic.version = 11 : i64} {
  func.func @_policy_kernel_train(%arg0: i32, %arg1: memref<16x128xf32, #tpu.memory_space<vmem>>, %arg2: memref<32x128xf32, #tpu.memory_space<vmem>>, %arg3: memref<32x16xf32, #tpu.memory_space<vmem>>, %arg4: memref<32x1xf32, #tpu.memory_space<vmem>>, %arg5: memref<8x32xf32, #tpu.memory_space<vmem>>, %arg6: memref<8x1xf32, #tpu.memory_space<vmem>>, %arg7: memref<8x128xf32, #tpu.memory_space<vmem>>) attributes {dimension_semantics = [#tpu.dimension_semantics<parallel>], iteration_bounds = array<i64: 4>, scalar_prefetch = 0 : i64, scratch_operands = 0 : i64, tpu.core_type = #tpu.core_type<tc>, window_params = [{transform_indices = @transform_0, window_bounds = array<i64: 16, 128>}, {transform_indices = @transform_1, window_bounds = array<i64: 32, 128>}, {pipeline_mode = #tpu.pipeline_mode<synchronous>, transform_indices = @transform_2, window_bounds = array<i64: 32, 16>}, {pipeline_mode = #tpu.pipeline_mode<synchronous>, transform_indices = @transform_3, window_bounds = array<i64: 32, 1>}, {pipeline_mode = #tpu.pipeline_mode<synchronous>, transform_indices = @transform_4, window_bounds = array<i64: 8, 32>}, {pipeline_mode = #tpu.pipeline_mode<synchronous>, transform_indices = @transform_5, window_bounds = array<i64: 8, 1>}, {transform_indices = @transform_6, window_bounds = array<i64: 8, 128>}]} {
    %c0 = arith.constant 0 : index
    %c0_0 = arith.constant 0 : index
    %0 = vector.load %arg3[%c0, %c0_0] : memref<32x16xf32, #tpu.memory_space<vmem>>, vector<32x16xf32>
    %c0_1 = arith.constant 0 : index
    %c0_2 = arith.constant 0 : index
    %1 = vector.load %arg1[%c0_1, %c0_2] : memref<16x128xf32, #tpu.memory_space<vmem>>, vector<16x128xf32>
    %cst = arith.constant dense<0.000000e+00> : vector<32x128xf32>
    %2 = tpu.matmul %0, %1, %cst {dimension_numbers = #tpu.dot_dimension_numbers<[1], [0], [0], [1], [0, 0, 1, 1], [], []>} : vector<32x16xf32>, vector<16x128xf32>, vector<32x128xf32> -> vector<32x128xf32>
    %c0_3 = arith.constant 0 : index
    %c0_4 = arith.constant 0 : index
    %3 = vector.load %arg4[%c0_3, %c0_4] : memref<32x1xf32, #tpu.memory_space<vmem>>, vector<32x1xf32>
    %4 = vector.broadcast %3 : vector<32x1xf32> to vector<32x128xf32>
    %5 = arith.addf %2, %4 : vector<32x128xf32>
    %c0_5 = arith.constant 0 : index
    %c0_6 = arith.constant 0 : index
    %6 = vector.load %arg2[%c0_5, %c0_6] : memref<32x128xf32, #tpu.memory_space<vmem>>, vector<32x128xf32>
    %7 = arith.mulf %5, %6 : vector<32x128xf32>
    %cst_7 = arith.constant 0.000000e+00 : f32
    %8 = vector.broadcast %cst_7 : f32 to vector<32x128xf32>
    %9 = arith.maximumf %7, %8 : vector<32x128xf32>
    %c0_8 = arith.constant 0 : index
    %c0_9 = arith.constant 0 : index
    %10 = vector.load %arg5[%c0_8, %c0_9] : memref<8x32xf32, #tpu.memory_space<vmem>>, vector<8x32xf32>
    %cst_10 = arith.constant dense<0.000000e+00> : vector<8x128xf32>
    %11 = tpu.matmul %10, %9, %cst_10 {dimension_numbers = #tpu.dot_dimension_numbers<[1], [0], [0], [1], [0, 0, 1, 1], [], []>} : vector<8x32xf32>, vector<32x128xf32>, vector<8x128xf32> -> vector<8x128xf32>
    %c0_11 = arith.constant 0 : index
    %c0_12 = arith.constant 0 : index
    %12 = vector.load %arg6[%c0_11, %c0_12] : memref<8x1xf32, #tpu.memory_space<vmem>>, vector<8x1xf32>
    %13 = vector.broadcast %12 : vector<8x1xf32> to vector<8x128xf32>
    %14 = arith.addf %11, %13 : vector<8x128xf32>
    %c0_13 = arith.constant 0 : index
    %c0_14 = arith.constant 0 : index
    %15 = vector.load %arg7[%c0_13, %c0_14] : memref<8x128xf32, #tpu.memory_space<vmem>>, vector<8x128xf32>
    tpu.vector_store %arg7[%c0_13, %c0_14], %14 {strides = array<i32>} : memref<8x128xf32, #tpu.memory_space<vmem>>, vector<8x128xf32>,
    return
  }
  func.func @transform_0(%arg0: i32) -> (i32, i32) {
    %c0_i32 = arith.constant 0 : i32
    %c0_i32_0 = arith.constant 0 : i32
    return %c0_i32, %arg0 : i32, i32
  }
  func.func @transform_1(%arg0: i32) -> (i32, i32) {
    %c0_i32 = arith.constant 0 : i32
    %c0_i32_0 = arith.constant 0 : i32
    return %c0_i32, %arg0 : i32, i32
  }
  func.func @transform_2(%arg0: i32) -> (i32, i32) {
    %c0_i32 = arith.constant 0 : i32
    %c0_i32_0 = arith.constant 0 : i32
    %c0_i32_1 = arith.constant 0 : i32
    return %c0_i32, %c0_i32_0 : i32, i32
  }
  func.func @transform_3(%arg0: i32) -> (i32, i32) {
    %c0_i32 = arith.constant 0 : i32
    %c0_i32_0 = arith.constant 0 : i32
    %c0_i32_1 = arith.constant 0 : i32
    return %c0_i32, %c0_i32_0 : i32, i32
  }
  func.func @transform_4(%arg0: i32) -> (i32, i32) {
    %c0_i32 = arith.constant 0 : i32
    %c0_i32_0 = arith.constant 0 : i32
    %c0_i32_1 = arith.constant 0 : i32
    return %c0_i32, %c0_i32_0 : i32, i32
  }
  func.func @transform_5(%arg0: i32) -> (i32, i32) {
    %c0_i32 = arith.constant 0 : i32
    %c0_i32_0 = arith.constant 0 : i32
    %c0_i32_1 = arith.constant 0 : i32
    return %c0_i32, %c0_i32_0 : i32, i32
  }
  func.func @transform_6(%arg0: i32) -> (i32, i32) {
    %c0_i32 = arith.constant 0 : i32
    %c0_i32_0 = arith.constant 0 : i32
    return %c0_i32, %arg0 : i32, i32
  }
}

</mosaic_0001>

<llo_original>
// kernel: tpu_custom_call.1
$region0: #{tpu_custom_call.1}
  #allocation0 [shape = 'u32[]', space=smem, size = 0x4, offset = 0x4, fixed_abs, tag = 'smem constant byte address 0x4 - core index']
  #allocation1 [shape = 'u32[144,128]{1,0:T(1,128)}', space=vmem, size = 0x12000, scoped, tag = 'internal scratch']
  %s0 = inlined_call_operand.vmem [shape: f32[16,512], index: 0, kind: input, shape index: {}]
  %s1 = inlined_call_operand.hbm [shape: f32[32,512], index: 1, kind: input, shape index: {}]
  %s2 = inlined_call_operand.vmem [shape: f32[32,16], index: 2, kind: input, shape index: {}]
  %s3 = inlined_call_operand.vmem [shape: f32[32,1], index: 3, kind: input, shape index: {}]
  %s4 = inlined_call_operand.vmem [shape: f32[8,32], index: 4, kind: input, shape index: {}]
  %s5 = inlined_call_operand.vmem [shape: f32[8,1], index: 5, kind: input, shape index: {}]
  %s6 = inlined_call_operand.hbm [shape: f32[8,512], index: 6, kind: output, shape index: {}]
  %s7 = sld [smem:[#allocation0]]
  $region99: #{tpu_custom_call.1} parent=0
    _
  %s9 = ssub.s32 1, %s7
  %s10 = scalar_select 0, %s9, %s7
  $region1: #{tpu_custom_call.1} parent=0
    #allocation2 [shape = 'u8[16384]{0}', space=vmem, size = 0x4000, scoped, tag = 'input window, operand 0']
    #allocation3 [shape = 'u8[32768]{0}', space=vmem, size = 0x8000, scoped, tag = 'input window, operand 1']
    #allocation4 [shape = 's32[2]{0}', space=sflag, size = 0x8, scoped, tag = 'scoped memory for tpu_custom_call.1']
    #allocation5 [shape = 's32[2]{0}', space=sflag, size = 0x8, scoped, tag = 'scoped memory for tpu_custom_call.1']
    #allocation6 [shape = 'u8[8192]{0}', space=vmem, size = 0x2000, scoped, tag = 'output window, operand 0']
    %11 = vsyncpa [#allocation4], 0
    %s12 = scalar_lea.sflag [#allocation4], 1
    %13 = vsyncpa %s12, 0
    %14 = vsyncpa [#allocation5], 0
    %s15 = scalar_lea.sflag [#allocation5], 1
    %16 = vsyncpa %s15, 0
    loop: start=0, step=1, limit=6
    $region2: #{tpu_custom_call.1} parent=1 // loop_pre_header
      _
    $region3: #{tpu_custom_call.1} parent=1 // loop_header
      %s18 = sphi 0, %s22
      %p19 = scmp.ge.s32.totalorder %s18, 6
      %s28 = sphi 0, %s30
      %s31 = sphi 0, %s28
      %s32 = sphi 0, %s31
      %s48 = sphi 0, %s32
      %s54 = sphi 0, %s56
      %s57 = sphi 0, %s54
      %s58 = sphi 0, %s57
      %s74 = sphi 0, %s58
      %s78 = sphi 0, %s78
      %s80 = sphi 0, %s78
      %s81 = sphi 0, %s80
      %s95 = sphi 0, %s81
      %s99 = sphi 0, %s99
      %s101 = sphi 0, %s99
      %s102 = sphi 0, %s101
      %s116 = sphi 0, %s102
      %s120 = sphi 0, %s120
      %s122 = sphi 0, %s120
      %s123 = sphi 0, %s122
      %s137 = sphi 0, %s123
      %s141 = sphi 0, %s141
      %s143 = sphi 0, %s141
      %s144 = sphi 0, %s143
      %s158 = sphi 0, %s144
      %s164 = sphi 0, %s166
      %s167 = sphi 0, %s164
      %s168 = sphi 0, %s167
      %s184 = sphi 0, %s168
    $region4: #{tpu_custom_call.1} parent=1 // loop_header_branch
      %21 = sbr.rel (%p19) target = $region8
    $region5: #{tpu_custom_call.1} parent=1 // loop_body
      %s23 = ssub.s32 %s18, 1
      %s24 = ssub.s32 %s18, 2
      %s25 = sadd.s32 %s18, 1
      %s26 = ssub.s32 %s18, %s25
      %p27 = scmp.eq.s32.totalorder %s26, 0
      %s29 = sadd.s32 %s28, 1
      %s30 = scalar_select %p27, %s28, %s29
      %p33 = pneg %p27
      %p34 = scmp.eq.s32.totalorder %s18, 3
      %p35 = por %p33, %p34
      %p36 = scmp.ne.s32.totalorder %s28, %s31
      %p37 = scmp.eq.s32.totalorder %s18, 0
      %p38 = por %p36, %p37
      %p39 = scmp.ne.s32.totalorder %s28, %s31
      %p40 = scmp.eq.s32.totalorder %s23, 3
      %p41 = por %p39, %p40
      %p42 = scmp.ne.s32.totalorder %s31, %s32
      %p43 = scmp.eq.s32.totalorder %s23, 0
      %p44 = por %p42, %p43
      %p45 = scmp.ne.s32.totalorder %s31, %s32
      %p46 = scmp.eq.s32.totalorder %s24, 3
      %p47 = por %p45, %p46
      %p49 = scmp.ne.s32.totalorder %s32, %s48
      %p50 = scmp.eq.s32.totalorder %s24, 0
      %p51 = por %p49, %p50
      %s52 = ssub.s32 %s18, %s25
      %p53 = scmp.eq.s32.totalorder %s52, 0
      %s55 = sadd.s32 %s54, 1
      %s56 = scalar_select %p53, %s54, %s55
      %p59 = pneg %p53
      %p60 = scmp.eq.s32.totalorder %s18, 3
      %p61 = por %p59, %p60
      %p62 = scmp.ne.s32.totalorder %s54, %s57
      %p63 = scmp.eq.s32.totalorder %s18, 0
      %p64 = por %p62, %p63
      %p65 = scmp.ne.s32.totalorder %s54, %s57
      %p66 = scmp.eq.s32.totalorder %s23, 3
      %p67 = por %p65, %p66
      %p68 = scmp.ne.s32.totalorder %s57, %s58
      %p69 = scmp.eq.s32.totalorder %s23, 0
      %p70 = por %p68, %p69
      %p71 = scmp.ne.s32.totalorder %s57, %s58
      %p72 = scmp.eq.s32.totalorder %s24, 3
      %p73 = por %p71, %p72
      %p75 = scmp.ne.s32.totalorder %s58, %s74
      %p76 = scmp.eq.s32.totalorder %s24, 0
      %p77 = por %p75, %p76
      %s79 = sadd.s32 %s78, 1
      %p82 = scmp.eq.s32.totalorder %s18, 3
      %p83 = scmp.ne.s32.totalorder %s78, %s80
      %p84 = scmp.eq.s32.totalorder %s18, 0
      %p85 = por %p83, %p84
      %p86 = scmp.ne.s32.totalorder %s78, %s80
      %p87 = scmp.eq.s32.totalorder %s23, 3
      %p88 = por %p86, %p87
      %p89 = scmp.ne.s32.totalorder %s80, %s81
      %p90 = scmp.eq.s32.totalorder %s23, 0
      %p91 = por %p89, %p90
      %p92 = scmp.ne.s32.totalorder %s80, %s81
      %p93 = scmp.eq.s32.totalorder %s24, 3
      %p94 = por %p92, %p93
      %p96 = scmp.ne.s32.totalorder %s81, %s95
      %p97 = scmp.eq.s32.totalorder %s24, 0
      %p98 = por %p96, %p97
      %s100 = sadd.s32 %s99, 1
      %p103 = scmp.eq.s32.totalorder %s18, 3
      %p104 = scmp.ne.s32.totalorder %s99, %s101
      %p105 = scmp.eq.s32.totalorder %s18, 0
      %p106 = por %p104, %p105
      %p107 = scmp.ne.s32.totalorder %s99, %s101
      %p108 = scmp.eq.s32.totalorder %s23, 3
      %p109 = por %p107, %p108
      %p110 = scmp.ne.s32.totalorder %s101, %s102
      %p111 = scmp.eq.s32.totalorder %s23, 0
      %p112 = por %p110, %p111
      %p113 = scmp.ne.s32.totalorder %s101, %s102
      %p114 = scmp.eq.s32.totalorder %s24, 3
      %p115 = por %p113, %p114
      %p117 = scmp.ne.s32.totalorder %s102, %s116
      %p118 = scmp.eq.s32.totalorder %s24, 0
      %p119 = por %p117, %p118
      %s121 = sadd.s32 %s120, 1
      %p124 = scmp.eq.s32.totalorder %s18, 3
      %p125 = scmp.ne.s32.totalorder %s120, %s122
      %p126 = scmp.eq.s32.totalorder %s18, 0
      %p127 = por %p125, %p126
      %p128 = scmp.ne.s32.totalorder %s120, %s122
      %p129 = scmp.eq.s32.totalorder %s23, 3
      %p130 = por %p128, %p129
      %p131 = scmp.ne.s32.totalorder %s122, %s123
      %p132 = scmp.eq.s32.totalorder %s23, 0
      %p133 = por %p131, %p132
      %p134 = scmp.ne.s32.totalorder %s122, %s123
      %p135 = scmp.eq.s32.totalorder %s24, 3
      %p136 = por %p134, %p135
      %p138 = scmp.ne.s32.totalorder %s123, %s137
      %p139 = scmp.eq.s32.totalorder %s24, 0
      %p140 = por %p138, %p139
      %s142 = sadd.s32 %s141, 1
      %p145 = scmp.eq.s32.totalorder %s18, 3
      %p146 = scmp.ne.s32.totalorder %s141, %s143
      %p147 = scmp.eq.s32.totalorder %s18, 0
      %p148 = por %p146, %p147
      %p149 = scmp.ne.s32.totalorder %s141, %s143
      %p150 = scmp.eq.s32.totalorder %s23, 3
      %p151 = por %p149, %p150
      %p152 = scmp.ne.s32.totalorder %s143, %s144
      %p153 = scmp.eq.s32.totalorder %s23, 0
      %p154 = por %p152, %p153
      %p155 = scmp.ne.s32.totalorder %s143, %s144
      %p156 = scmp.eq.s32.totalorder %s24, 3
      %p157 = por %p155, %p156
      %p159 = scmp.ne.s32.totalorder %s144, %s158
      %p160 = scmp.eq.s32.totalorder %s24, 0
      %p161 = por %p159, %p160
      %s162 = ssub.s32 %s18, %s25
      %p163 = scmp.eq.s32.totalorder %s162, 0
      %s165 = sadd.s32 %s164, 1
      %s166 = scalar_select %p163, %s164, %s165
      %p169 = pneg %p163
      %p170 = scmp.eq.s32.totalorder %s18, 3
      %p171 = por %p169, %p170
      %p172 = scmp.ne.s32.totalorder %s164, %s167
      %p173 = scmp.eq.s32.totalorder %s18, 0
      %p174 = por %p172, %p173
      %p175 = scmp.ne.s32.totalorder %s164, %s167
      %p176 = scmp.eq.s32.totalorder %s23, 3
      %p177 = por %p175, %p176
      %p178 = scmp.ne.s32.totalorder %s167, %s168
      %p179 = scmp.eq.s32.totalorder %s23, 0
      %p180 = por %p178, %p179
      %p181 = scmp.ne.s32.totalorder %s167, %s168
      %p182 = scmp.eq.s32.totalorder %s24, 3
      %p183 = por %p181, %p182
      %p185 = scmp.ne.s32.totalorder %s168, %s184
      %p186 = scmp.eq.s32.totalorder %s24, 0
      %p187 = por %p185, %p186
      %p188 = scmp.le.s32.totalorder 1, %s18
      %p189 = scmp.lt.s32.totalorder %s18, 5
      %p190 = pnand %p188, %p189
      %p191 = pneg %p190
      // Predicated region
      $region9: #{tpu_custom_call.1} parent=5 // pred_check
        _
      $region10: #{tpu_custom_call.1} parent=5 // pred_check_branch
        %193 = sbr.rel (%p190) target = $region12
      $region11: #{tpu_custom_call.1} parent=5 // pred_region
        %s194 = ssub.s32 %s18, 1
        // Predicated region
        $region13: #{tpu_custom_call.1} parent=11 // pred_check
          %p195 = pneg %p91
        $region14: #{tpu_custom_call.1} parent=11 // pred_check_branch
          %197 = sbr.rel (%p195) target = $region16
        $region15: #{tpu_custom_call.1} parent=11 // pred_region
          _
        $region16: #{tpu_custom_call.1} parent=11 // pred_fallthru
          _
        // Predicated region
        $region17: #{tpu_custom_call.1} parent=11 // pred_check
          %p198 = pneg %p112
        $region18: #{tpu_custom_call.1} parent=11 // pred_check_branch
          %200 = sbr.rel (%p198) target = $region20
        $region19: #{tpu_custom_call.1} parent=11 // pred_region
          _
        $region20: #{tpu_custom_call.1} parent=11 // pred_fallthru
          _
        // Predicated region
        $region21: #{tpu_custom_call.1} parent=11 // pred_check
          %p201 = pneg %p133
        $region22: #{tpu_custom_call.1} parent=11 // pred_check_branch
          %203 = sbr.rel (%p201) target = $region24
        $region23: #{tpu_custom_call.1} parent=11 // pred_region
          _
        $region24: #{tpu_custom_call.1} parent=11 // pred_fallthru
          _
        // Predicated region
        $region25: #{tpu_custom_call.1} parent=11 // pred_check
          %p204 = pneg %p154
        $region26: #{tpu_custom_call.1} parent=11 // pred_check_branch
          %206 = sbr.rel (%p204) target = $region28
        $region27: #{tpu_custom_call.1} parent=11 // pred_region
          _
        $region28: #{tpu_custom_call.1} parent=11 // pred_fallthru
          _
      $region12: #{tpu_custom_call.1} parent=5 // pred_fallthru
        _
      %p207 = scmp.lt.s32.totalorder %s18, 4
      // Predicated region
      $region29: #{tpu_custom_call.1} parent=5 // pred_check
        %p208 = pneg %p207
      $region30: #{tpu_custom_call.1} parent=5 // pred_check_branch
        %210 = sbr.rel (%p208) target = $region32
      $region31: #{tpu_custom_call.1} parent=5 // pred_region
        // Predicated region
        $region33: #{tpu_custom_call.1} parent=31 // pred_check
          %p211 = pneg %p38
        $region34: #{tpu_custom_call.1} parent=31 // pred_check_branch
          %213 = sbr.rel (%p211) target = $region36
        $region35: #{tpu_custom_call.1} parent=31 // pred_region
          %s214 = sand.u32 %s28, 1
          %s215 = sand.u32 %s28, 1
          %s216 = smul.addr %s215, 16
          %s217 = scalar_lea.vmem [#allocation2], %s216
          %s218 = smul.addr %s18, 8
          %s219 = scalar_lea.vmem %s0, %s218
          // Predicated region
          $region37: #{tpu_custom_call.1} parent=35 // pred_check
            _
          $region38: #{tpu_custom_call.1} parent=35 // pred_check_branch
            %221 = sbr.rel (0) target = $region40
          $region39: #{tpu_custom_call.1} parent=35 // pred_region
            // Predicated region
            $region41: #{tpu_custom_call.1} parent=39 // pred_check
              _
            $region42: #{tpu_custom_call.1} parent=39 // pred_check_branch
              %223 = sbr.rel (0) target = $region44
            $region43: #{tpu_custom_call.1} parent=39 // pred_region
              // Predicated region
              $region56: #{tpu_custom_call.1} parent=43 // pred_check
                _
              $region57: #{tpu_custom_call.1} parent=43 // pred_check_branch
                %241 = sbr.rel (0) target = $region59
              $region58: #{tpu_custom_call.1} parent=43 // pred_region
                loop: start=0, step=1, limit=1
                $region60: #{tpu_custom_call.1} parent=58 // loop_pre_header
                  _
                $region61: #{tpu_custom_call.1} parent=58 // loop_header
                  %s243 = sphi 0, %s247
                  %p244 = scmp.ge.s32.totalorder %s243, 1
                  %s248 = sphi %s219, %s219
                  %s249 = sphi %s217, %s217
                $region62: #{tpu_custom_call.1} parent=58 // loop_header_branch
                  %246 = sbr.rel (%p244) target = $region66
                $region63: #{tpu_custom_call.1} parent=58 // loop_body
                  %v250 = vld [vmem:[%s248] sm:$0xff]
                  %251 = vst [vmem:[%s249] sm:$0xff] %v250
                  %v252 = vld [vmem:[%s248 + $0x20] sm:$0xff]
                  %253 = vst [vmem:[%s249 + $0x8] sm:$0xff] %v252
                $region64: #{tpu_custom_call.1} parent=58 // loop_footer
                  %s247 = sadd.s32 1, %s243
                $region65: #{tpu_custom_call.1} parent=58 // loop_footer_branch
                  %242 = sbr.rel target = $region61
                $region66: #{tpu_custom_call.1} parent=58 // loop_exit
                  _
              $region59: #{tpu_custom_call.1} parent=43 // pred_fallthru
                _
              // Predicated region
              $region67: #{tpu_custom_call.1} parent=43 // pred_check
                _
              $region68: #{tpu_custom_call.1} parent=43 // pred_check_branch
                %255 = sbr.rel target = $region70
              $region69: #{tpu_custom_call.1} parent=43 // pred_region
                _
              $region70: #{tpu_custom_call.1} parent=43 // pred_fallthru
                _
            $region44: #{tpu_custom_call.1} parent=39 // pred_fallthru
              _
            // Predicated region
            $region45: #{tpu_custom_call.1} parent=39 // pred_check
              _
            $region46: #{tpu_custom_call.1} parent=39 // pred_check_branch
              %225 = sbr.rel target = $region48
            $region47: #{tpu_custom_call.1} parent=39 // pred_region
              %s227 = ssub.s32 256, 1
              loop: start=0, step=1, limit=1
              $region49: #{tpu_custom_call.1} parent=47 // loop_pre_header
                _
              $region50: #{tpu_custom_call.1} parent=47 // loop_header
                %s229 = sphi 0, %s233
                %p230 = scmp.ge.s32.totalorder %s229, 1
                %s234 = sphi %s219, %s219
                %s235 = sphi %s217, %s217
              $region51: #{tpu_custom_call.1} parent=47 // loop_header_branch
                %232 = sbr.rel (%p230) target = $region55
              $region52: #{tpu_custom_call.1} parent=47 // loop_body
                %v236 = vld [vmem:[%s234] sm:%s227]
                %237 = vst [vmem:[%s235] sm:%s227] %v236
                %v238 = vld [vmem:[%s234 + $0x20] sm:%s227]
                %239 = vst [vmem:[%s235 + $0x8] sm:%s227] %v238
              $region53: #{tpu_custom_call.1} parent=47 // loop_footer
                %s233 = sadd.s32 1, %s229
              $region54: #{tpu_custom_call.1} parent=47 // loop_footer_branch
                %228 = sbr.rel target = $region50
              $region55: #{tpu_custom_call.1} parent=47 // loop_exit
                _
            $region48: #{tpu_custom_call.1} parent=39 // pred_fallthru
              _
          $region40: #{tpu_custom_call.1} parent=35 // pred_fallthru
            _
          %256 = vnop
        $region36: #{tpu_custom_call.1} parent=31 // pred_fallthru
          _
        // Predicated region
        $region71: #{tpu_custom_call.1} parent=31 // pred_check
          %p257 = pneg %p64
        $region72: #{tpu_custom_call.1} parent=31 // pred_check_branch
          %259 = sbr.rel (%p257) target = $region74
        $region73: #{tpu_custom_call.1} parent=31 // pred_region
          %s260 = sand.u32 %s54, 1
          %s261 = scalar_lea.sflag [#allocation4], %s260
          %s262 = sand.u32 %s54, 1
          %s263 = smul.addr %s262, 32
          %s264 = scalar_lea.vmem [#allocation3], %s263
          %s266 = ssub.s32 512, 512
          %267 = vsyncadd %s261, %s266
          %s268 = smul.addr %s18, 128
          %s269 = scalar_lea.hbm %s1, %s268
          %s270 = sshll.u32 %s264, 4
          %s271 = int_to_ptr.vmem [resolvable:$true] %s270
          %276 = dma.hbm_to_vmem [thread:$0]  %s269, 512, %s271, %s261, 512, 128, 8
        $region74: #{tpu_custom_call.1} parent=31 // pred_fallthru
          _
      $region32: #{tpu_custom_call.1} parent=5 // pred_fallthru
        _
      %p277 = scmp.le.s32.totalorder 1, %s18
      %p278 = scmp.lt.s32.totalorder %s18, 5
      %p279 = pnand %p277, %p278
      %p280 = pneg %p279
      // Predicated region
      $region75: #{tpu_custom_call.1} parent=5 // pred_check
        _
      $region76: #{tpu_custom_call.1} parent=5 // pred_check_branch
        %282 = sbr.rel (%p279) target = $region78
      $region77: #{tpu_custom_call.1} parent=5 // pred_region
        %s283 = ssub.s32 %s18, 1
        %s284 = sand.u32 %s31, 1
        %s285 = sand.u32 %s31, 1
        %s286 = smul.addr %s285, 16
        %s287 = scalar_lea.vmem [#allocation2], %s286
        // Predicated region
        $region79: #{tpu_custom_call.1} parent=77 // pred_check
          %p288 = pneg %p44
        $region80: #{tpu_custom_call.1} parent=77 // pred_check_branch
          %290 = sbr.rel (%p288) target = $region82
        $region81: #{tpu_custom_call.1} parent=77 // pred_region
          _
        $region82: #{tpu_custom_call.1} parent=77 // pred_fallthru
          _
        %s291 = sand.u32 %s57, 1
        %s292 = scalar_lea.sflag [#allocation4], %s291
        %s293 = sand.u32 %s57, 1
        %s294 = smul.addr %s293, 32
        %s295 = scalar_lea.vmem [#allocation3], %s294
        // Predicated region
        $region83: #{tpu_custom_call.1} parent=77 // pred_check
          %p296 = pneg %p70
        $region84: #{tpu_custom_call.1} parent=77 // pred_check_branch
          %298 = sbr.rel (%p296) target = $region86
        $region85: #{tpu_custom_call.1} parent=77 // pred_region
          %299 = dma.done %s292, 512
        $region86: #{tpu_custom_call.1} parent=77 // pred_fallthru
          _
        %s300 = sand.u32 %s31, 1
        %s301 = sand.u32 %s31, 1
        %s302 = smul.addr %s301, 16
        %s303 = scalar_lea.vmem [#allocation2], %s302
        %p304 = pneg %p44
        %p305 = pneg %p41
        %s306 = sand.u32 %s57, 1
        %s307 = scalar_lea.sflag [#allocation4], %s306
        %s308 = sand.u32 %s57, 1
        %s309 = smul.addr %s308, 32
        %s310 = scalar_lea.vmem [#allocation3], %s309
        %p311 = pneg %p70
        %p312 = pneg %p67
        %p313 = pneg %p91
        %p314 = pneg %p88
        %p315 = pneg %p112
        %p316 = pneg %p109
        %p317 = pneg %p133
        %p318 = pneg %p130
        %p319 = pneg %p154
        %p320 = pneg %p151
        %p321 = pneg %p180
        %p322 = pneg %p177
        %s323 = sand.u32 %s167, 1
        %s324 = scalar_lea.sflag [#allocation5], %s323
        %s325 = sand.u32 %s167, 1
        %s326 = smul.addr %s325, 8
        %s327 = scalar_lea.vmem [#allocation6], %s326
        %v328 = vld [vmem:[%s2] sm:$0xff]
        %v329 = vld [vmem:[%s2 + $0x8] sm:$0xff]
        %v330 = vld [vmem:[%s2 + $0x10] sm:$0xff]
        %v331 = vld [vmem:[%s2 + $0x18] sm:$0xff]
        %v332 = vld [vmem:[%s287] sm:$0xff]
        %v333 = vld [vmem:[%s287 + $0x8] sm:$0xff]
        %v334 = vld [vmem:[%s3] sm:$0xff]
        %v335 = vld [vmem:[%s3 + $0x8] sm:$0xff]
        %v336 = vld [vmem:[%s3 + $0x10] sm:$0xff]
        %v337 = vld [vmem:[%s3 + $0x18] sm:$0xff]
        %339 = vset.pattern.permute.xlu0 0
        %340 = vperm.xlu0 %339, %v334
        %v341 = vpop.permute.xlu0 %340
        %344 = vset.pattern.permute.xlu0 0
        %345 = vperm.xlu0 %344, %v335
        %v346 = vpop.permute.xlu0 %345
        %349 = vset.pattern.permute.xlu0 0
        %350 = vperm.xlu0 %349, %v336
        %v351 = vpop.permute.xlu0 %350
        %354 = vset.pattern.permute.xlu0 0
        %355 = vperm.xlu0 %354, %v337
        %v356 = vpop.permute.xlu0 %355
        %vm358 = vcmask 130048
        %v360 = vsel %vm358, %v328, 0
        %v363 = vsel %vm358, %v329, 0
        %v366 = vsel %vm358, %v330, 0
        %v369 = vsel %vm358, %v331, 0
        %371 = vmatprep.subr.mxu0 0.0
        %372 = vmatpush1.msra.mxu0 0.0
        %373 = vmatprep.subr.mxu0 0.0
        %374 = vmatpush1.msra.mxu0 0.0
        %375 = vmatprep.subr.mxu0 0.0
        %376 = vmatpush1.msra.mxu0 0.0
        %377 = vmatprep.subr.mxu0 0.0
        %378 = vmatpush1.msra.mxu0 0.0
        %379 = vmatprep.subr.mxu0 0.0
        %380 = vmatpush1.msra.mxu0 0.0
        %381 = vmatprep.subr.mxu0 0.0
        %382 = vmatpush1.msra.mxu0 0.0
        %383 = vmatprep.subr.mxu0 0.0
        %384 = vmatpush1.msra.mxu0 0.0
        %385 = vmatprep.subr.mxu0 0.0
        %386 = vmatpush1.msra.mxu0 0.0
        %387 = vmatprep.subr.mxu0 0.0
        %388 = vmatpush1.msra.mxu0 0.0
        %389 = vmatprep.subr.mxu0 0.0
        %390 = vmatpush1.msra.mxu0 0.0
        %391 = vmatprep.subr.mxu0 0.0
        %392 = vmatpush1.msra.mxu0 0.0
        %393 = vmatprep.subr.mxu0 0.0
        %394 = vmatpush1.msra.mxu0 0.0
        %395 = vmatprep.subr.mxu0 0.0
        %396 = vmatpush1.msra.mxu0 0.0
        %397 = vmatprep.subr.mxu0 0.0
        %398 = vmatpush1.msra.mxu0 0.0
        %399 = vmatprep.subr.mxu0 0.0
        %400 = vmatpush1.msra.mxu0 %v333
        %401 = vmatprep.subr.mxu0 0.0
        %402 = vmatpush1.msra.mxu0 %v332
        %403 = vmatprep.subr.mxu0 0.0
        %404 = vmatpush2.msra.mxu0 0.0
        %405 = vmatprep.subr.mxu0 0.0
        %406 = vmatpush2.msra.mxu0 0.0
        %407 = vmatprep.subr.mxu0 0.0
        %408 = vmatpush2.msra.mxu0 0.0
        %409 = vmatprep.subr.mxu0 0.0
        %410 = vmatpush2.msra.mxu0 0.0
        %411 = vmatprep.subr.mxu0 0.0
        %412 = vmatpush2.msra.mxu0 0.0
        %413 = vmatprep.subr.mxu0 0.0
        %414 = vmatpush2.msra.mxu0 0.0
        %415 = vmatprep.subr.mxu0 0.0
        %416 = vmatpush2.msra.mxu0 0.0
        %417 = vmatprep.subr.mxu0 0.0
        %418 = vmatpush2.msra.mxu0 0.0
        %419 = vmatprep.subr.mxu0 0.0
        %420 = vmatpush2.msra.mxu0 0.0
        %421 = vmatprep.subr.mxu0 0.0
        %422 = vmatpush2.msra.mxu0 0.0
        %423 = vmatprep.subr.mxu0 0.0
        %424 = vmatpush2.msra.mxu0 0.0
        %425 = vmatprep.subr.mxu0 0.0
        %426 = vmatpush2.msra.mxu0 0.0
        %427 = vmatprep.subr.mxu0 0.0
        %428 = vmatpush2.msra.mxu0 0.0
        %429 = vmatprep.subr.mxu0 0.0
        %430 = vmatpush2.msra.mxu0 0.0
        %431 = vmatprep.subr.mxu0 0.0
        %432 = vmatpush2.msra.mxu0 0.0
        %433 = vmatprep.subr.mxu0 0.0
        %434 = vmatpush2.msra.mxu0 0.0
        %435 = vmatprep.mubr.f32.mxu0 0.0
        %436 = vmatmul.mubr.f32.gmra.mxu0 %v360
        %v437 = vpop.f32.mrf.mxu0
        %v438 = vadd.f32 %v341, %v437
        %v439 = vpop.f32.mrf.mxu0
        %440 = vmatprep.mubr.f32.mxu0 0.0
        %441 = vmatmul.mubr.f32.gmra.mxu0 %v363
        %v442 = vpop.f32.mrf.mxu0
        %v443 = vadd.f32 %v346, %v442
        %v444 = vpop.f32.mrf.mxu0
        %445 = vmatprep.mubr.f32.mxu0 0.0
        %446 = vmatmul.mubr.f32.gmra.mxu0 %v366
        %v447 = vpop.f32.mrf.mxu0
        %v448 = vadd.f32 %v351, %v447
        %v449 = vpop.f32.mrf.mxu0
        %450 = vmatprep.mubr.f32.mxu0 0.0
        %451 = vmatmul.mubr.f32.gmra.mxu0 %v369
        %v452 = vpop.f32.mrf.mxu0
        %v453 = vadd.f32 %v356, %v452
        %v454 = vpop.f32.mrf.mxu0
        %455 = vdwg.mxu0
        %v456 = vld [vmem:[%s295] sm:$0xff]
        %v457 = vld [vmem:[%s295 + $0x8] sm:$0xff]
        %v458 = vld [vmem:[%s295 + $0x10] sm:$0xff]
        %v459 = vld [vmem:[%s295 + $0x18] sm:$0xff]
        %v460 = vmul.f32 %v438, %v456
        %v461 = vmul.f32 %v443, %v457
        %v462 = vmul.f32 %v448, %v458
        %v463 = vmul.f32 %v453, %v459
        %v464 = vmax.f32 %v460, 0.0
        %v465 = vmax.f32 %v461, 0.0
        %v466 = vmax.f32 %v462, 0.0
        %v467 = vmax.f32 %v463, 0.0
        %v468 = vld [vmem:[%s4] sm:$0xff]
        %v469 = vld [vmem:[%s5] sm:$0xff]
        %471 = vset.pattern.permute.xlu0 0
        %472 = vperm.xlu0 %471, %v469
        %v473 = vpop.permute.xlu0 %472
        %vm475 = vcmask 261120
        %v477 = vsel %vm475, %v468, 0
        %479 = vmatprep.subr.mxu0 0.0
        %480 = vmatpush1.msra.mxu0 0.0
        %481 = vmatprep.subr.mxu0 0.0
        %482 = vmatpush1.msra.mxu0 0.0
        %483 = vmatprep.subr.mxu0 0.0
        %484 = vmatpush1.msra.mxu0 0.0
        %485 = vmatprep.subr.mxu0 0.0
        %486 = vmatpush1.msra.mxu0 0.0
        %487 = vmatprep.subr.mxu0 0.0
        %488 = vmatpush1.msra.mxu0 0.0
        %489 = vmatprep.subr.mxu0 0.0
        %490 = vmatpush1.msra.mxu0 0.0
        %491 = vmatprep.subr.mxu0 0.0
        %492 = vmatpush1.msra.mxu0 0.0
        %493 = vmatprep.subr.mxu0 0.0
        %494 = vmatpush1.msra.mxu0 0.0
        %495 = vmatprep.subr.mxu0 0.0
        %496 = vmatpush1.msra.mxu0 0.0
        %497 = vmatprep.subr.mxu0 0.0
        %498 = vmatpush1.msra.mxu0 0.0
        %499 = vmatprep.subr.mxu0 0.0
        %500 = vmatpush1.msra.mxu0 0.0
        %501 = vmatprep.subr.mxu0 0.0
        %502 = vmatpush1.msra.mxu0 0.0
        %503 = vmatprep.subr.mxu0 0.0
        %504 = vmatpush1.msra.mxu0 %v467
        %505 = vmatprep.subr.mxu0 0.0
        %506 = vmatpush1.msra.mxu0 %v466
        %507 = vmatprep.subr.mxu0 0.0
        %508 = vmatpush1.msra.mxu0 %v465
        %509 = vmatprep.subr.mxu0 0.0
        %510 = vmatpush1.msra.mxu0 %v464
        %511 = vmatprep.subr.mxu0 0.0
        %512 = vmatpush2.msra.mxu0 0.0
        %513 = vmatprep.subr.mxu0 0.0
        %514 = vmatpush2.msra.mxu0 0.0
        %515 = vmatprep.subr.mxu0 0.0
        %516 = vmatpush2.msra.mxu0 0.0
        %517 = vmatprep.subr.mxu0 0.0
        %518 = vmatpush2.msra.mxu0 0.0
        %519 = vmatprep.subr.mxu0 0.0
        %520 = vmatpush2.msra.mxu0 0.0
        %521 = vmatprep.subr.mxu0 0.0
        %522 = vmatpush2.msra.mxu0 0.0
        %523 = vmatprep.subr.mxu0 0.0
        %524 = vmatpush2.msra.mxu0 0.0
        %525 = vmatprep.subr.mxu0 0.0
        %526 = vmatpush2.msra.mxu0 0.0
        %527 = vmatprep.subr.mxu0 0.0
        %528 = vmatpush2.msra.mxu0 0.0
        %529 = vmatprep.subr.mxu0 0.0
        %530 = vmatpush2.msra.mxu0 0.0
        %531 = vmatprep.subr.mxu0 0.0
        %532 = vmatpush2.msra.mxu0 0.0
        %533 = vmatprep.subr.mxu0 0.0
        %534 = vmatpush2.msra.mxu0 0.0
        %535 = vmatprep.subr.mxu0 0.0
        %536 = vmatpush2.msra.mxu0 0.0
        %537 = vmatprep.subr.mxu0 0.0
        %538 = vmatpush2.msra.mxu0 0.0
        %539 = vmatprep.subr.mxu0 0.0
        %540 = vmatpush2.msra.mxu0 0.0
        %541 = vmatprep.subr.mxu0 0.0
        %542 = vmatpush2.msra.mxu0 0.0
        %543 = vmatprep.mubr.f32.mxu0 0.0
        %544 = vmatmul.mubr.f32.gmra.mxu0 %v477
        %v545 = vpop.f32.mrf.mxu0
        %v546 = vadd.f32 %v473, %v545
        %v547 = vpop.f32.mrf.mxu0
        %548 = vdwg.mxu0
        %549 = vst [vmem:[%s327] sm:$0xff] %v546
        %s550 = sand.u32 %s167, 1
        %s551 = scalar_lea.sflag [#allocation5], %s550
        %s552 = sand.u32 %s167, 1
        %s553 = smul.addr %s552, 8
        %s554 = scalar_lea.vmem [#allocation6], %s553
        // Predicated region
        $region87: #{tpu_custom_call.1} parent=77 // pred_check
          %p555 = pneg %p177
        $region88: #{tpu_custom_call.1} parent=77 // pred_check_branch
          %557 = sbr.rel (%p555) target = $region90
        $region89: #{tpu_custom_call.1} parent=77 // pred_region
          %s559 = ssub.s32 128, 128
          %560 = vsyncadd %s551, %s559
          %s561 = smul.addr %s23, 128
          %s562 = scalar_lea.hbm %s6, %s561
          %s564 = sshll.u32 %s554, 4
          %s565 = int_to_ptr.vmem [resolvable:$true] %s564
          %567 = dma.vmem_to_hbm [thread:$0]  %s565, 128, %s562, %s551
        $region90: #{tpu_custom_call.1} parent=77 // pred_fallthru
          _
      $region78: #{tpu_custom_call.1} parent=5 // pred_fallthru
        _
      %p568 = scmp.le.s32.totalorder 2, %s18
      // Predicated region
      $region91: #{tpu_custom_call.1} parent=5 // pred_check
        %p569 = pneg %p568
      $region92: #{tpu_custom_call.1} parent=5 // pred_check_branch
        %571 = sbr.rel (%p569) target = $region94
      $region93: #{tpu_custom_call.1} parent=5 // pred_region
        %s572 = ssub.s32 %s18, 2
        // Predicated region
        $region95: #{tpu_custom_call.1} parent=93 // pred_check
          %p573 = pneg %p183
        $region96: #{tpu_custom_call.1} parent=93 // pred_check_branch
          %575 = sbr.rel (%p573) target = $region98
        $region97: #{tpu_custom_call.1} parent=93 // pred_region
          %s576 = sand.u32 %s168, 1
          %s577 = scalar_lea.sflag [#allocation5], %s576
          %s578 = sand.u32 %s168, 1
          %s579 = smul.addr %s578, 8
          %s580 = scalar_lea.vmem [#allocation6], %s579
          %581 = dma.done %s577, 128
        $region98: #{tpu_custom_call.1} parent=93 // pred_fallthru
          _
      $region94: #{tpu_custom_call.1} parent=5 // pred_fallthru
        _
    $region6: #{tpu_custom_call.1} parent=1 // loop_footer
      %s22 = sadd.s32 1, %s18
    $region7: #{tpu_custom_call.1} parent=1 // loop_footer_branch
      %17 = sbr.rel target = $region3
    $region8: #{tpu_custom_call.1} parent=1 // loop_exit
      _
    %582 = vsyncpa [#allocation4], 1
    %s583 = scalar_lea.sflag [#allocation4], 1
    %584 = vsyncpa %s583, 1
    %585 = vsyncpa [#allocation5], 1
    %s586 = scalar_lea.sflag [#allocation5], 1
    %587 = vsyncpa %s586, 1

</llo_original>
